<compile_context>
chip_gen: v6e
topology: v6e:2x2x1
jax: 0.10.0
libtpu: 0.0.40
codegen_flags: <defaults>
</compile_context>

<pallas_src>
import jax
import jax.numpy as jnp
import numpy as np
from jax.experimental import pallas as pl
from jax.experimental.pallas import tpu as pltpu

_NEG_INF = -1e30  # finite mask fill; exp underflows to exactly 0 after max-subtraction


def _round_up(n, m):
    return -(-n // m) * m


def _masked_attn_pool_kernel(x_ref, bias_ref, w1_ref, b1_ref, w2_ref, b2_ref,
                             o_ref):
    # x_ref block: (TB, S, D); bias_ref block: (TB, S); weights are resident.
    TB, S, D = x_ref.shape
    x3 = x_ref[...]                                  # (TB, S, D)
    # Collapse leading dims -> one big MXU matmul with M = TB*S.
    # Wrapper guarantees S % 8 == 0, so this reshape is a layout no-op.
    x2 = x3.reshape(TB * S, D)                       # (TB*S, D)

    # Linear(D, H) + tanh on the MXU.
    # TODO(synk): on v6e/v7x a bf16 cast of (x2, w1) here (keeping f32
    # accumulation) would halve MXU passes; kept f32 to match reference numerics.
    h = jnp.tanh(
        jnp.dot(x2, w1_ref[...], preferred_element_type=jnp.float32)
        + b1_ref[...])                               # (TB*S, H)

    # Linear(H, 1) as VPU multiply + lane reduction (avoids an N=1 MXU matmul).
    s_col = (jnp.sum(h * w2_ref[...], axis=-1, keepdims=True)
             + b2_ref[...])                          # (TB*S, 1)

    # Back to per-batch layout (pure split of the leading dim) and apply the
    # additive mask bias (0 keep / -1e30 masked).
    scores = s_col.reshape(TB, S, 1)                 # (TB, S, 1)
    scores = scores + bias_ref[...][:, :, None]      # (TB, S, 1)

    # Softmax over the sequence axis (dim=1 of the original (B, S, 1) tensor).
    s_max = jnp.max(scores, axis=1, keepdims=True)   # (TB, 1, 1)
    e = jnp.exp(scores - s_max)                      # (TB, S, 1)
    denom = jnp.sum(e, axis=1, keepdims=True)        # (TB, 1, 1)
    weights = e / denom                              # exact; denom is tiny

    # (x * attn_weights).sum(dim=1). S is small here, so the VPU/XLU path is
    # fine. TODO(synk): for S >~ 128 switch to a batched matvec on the
    # otherwise-idle MXU.
    pooled = jnp.sum(x3 * weights, axis=1)           # (TB, D)
    o_ref[...] = pooled.astype(o_ref.dtype)


def _choose_batch_tile(B, S_pad, D, target_block_bytes, vmem_budget_bytes):
    """Rows per grid step, sized from the VMEM-inflated block footprint."""
    d_lanes = _round_up(D, 128)              # lane padding of the last dim in VMEM
    x_row = S_pad * d_lanes * 4              # VMEM bytes of one batch row of the x block
    bias_row = _round_up(S_pad, 128) * 4
    out_row = d_lanes * 4
    # Double-buffered x/bias/out plus headroom for in-kernel temps
    # (h = (tb*S, 128) f32, the (tb,S,1) softmax temps, pooling product).
    per_row = 2 * (x_row + bias_row + out_row) + 4 * x_row
    tb = min(target_block_bytes // x_row, vmem_budget_bytes // per_row)
    tb = max(8, (tb // 8) * 8)
    if B <= 8:
        return B                             # single block, full batch dims
    # Keep >= 2 grid steps so the "parallel" axis feeds both TensorCores (v7x).
    tb = min(tb, _round_up(-(-B // 2), 8))
    return max(8, tb)


def masked_attention_pool(x, w1, b1, w2, b2, mask=None, *,
                          target_block_bytes=4 << 20,
                          vmem_budget_bytes=40 << 20):
    """x: (B, S, D); mask: optional (B, S) (nonzero = keep). Returns (B, D).

    w1: (D, H), b1: (H,), w2: (H, 1), b2: (1,)  (i.e. already in x @ W form).
    """
    B, S, D = x.shape
    H = w1.shape[1]

    # Lane-dense additive bias instead of a (B, S, 1) float mask.
    if mask is None:
        bias = jnp.zeros((B, S), dtype=jnp.float32)
    else:
        bias = jnp.where(mask.reshape(B, S) != 0, 0.0, _NEG_INF).astype(jnp.float32)

    # One-time pad of the sequence dim to a multiple of 8 so the in-kernel
    # reshape is layout-free. Padded positions: x = 0, bias = -1e30 -> weight 0.
    S_pad = _round_up(S, 8)
    if S_pad != S:
        x = jnp.pad(x, ((0, 0), (0, S_pad - S), (0, 0)))
        bias = jnp.pad(bias, ((0, 0), (0, S_pad - S)), constant_values=_NEG_INF)

    tb = _choose_batch_tile(B, S_pad, D, target_block_bytes, vmem_budget_bytes)
    nb = pl.cdiv(B, tb)   # last block may be partial: no host-side batch pad

    b1_2d = b1.reshape(1, H)
    w2_row = w2.reshape(1, H)   # second linear applied as VPU multiply + reduce
    b2_2d = b2.reshape(1, 1)

    # TODO(synk): if D << 128 in production, present x as a lane-dense (B, S*D)
    # slab and widen the output last dim to avoid masked vst.msk stores.
    out = pl.pallas_call(
        _masked_attn_pool_kernel,
        out_shape=jax.ShapeDtypeStruct((B, D), x.dtype),
        grid_spec=pltpu.PrefetchScalarGridSpec(
            num_scalar_prefetch=0,
            grid=(nb,),
            in_specs=[
                pl.BlockSpec((tb, S_pad, D), lambda b: (b, 0, 0)),  # x block
                pl.BlockSpec((tb, S_pad), lambda b: (b, 0)),        # mask bias
                pl.BlockSpec((D, H), lambda b: (0, 0)),             # w1 (resident)
                pl.BlockSpec((1, H), lambda b: (0, 0)),             # b1
                pl.BlockSpec((1, H), lambda b: (0, 0)),             # w2 row
                pl.BlockSpec((1, 1), lambda b: (0, 0)),             # b2
            ],
            out_specs=pl.BlockSpec((tb, D), lambda b: (b, 0)),      # lane-dense slab
        ),
        compiler_params=pltpu.CompilerParams(
            # Batch-block axis is embarrassingly parallel (feeds both TCs on v7x).
            dimension_semantics=("parallel",),
            # Explicit: above v5e's 16 MiB scoped default, under v7x's 64 MiB/TC.
            vmem_limit_bytes=48 * 1024 * 1024,
        ),
    )(x, bias, w1, b1_2d, w2_row, b2_2d)

    return out


def _reference(x, w1, b1, w2, b2, mask=None):
    scores = jnp.tanh(x @ w1 + b1) @ w2 + b2          # (B, S, 1)
    if mask is not None:
        scores = jnp.where(mask[..., None] == 0, -jnp.inf, scores)
    weights = jax.nn.softmax(scores, axis=1)
    return (x * weights).sum(axis=1)


def _run_case(key, B, S, D, H):
    kx, km, k1, k2, k3, k4 = jax.random.split(key, 6)
    x = jax.random.normal(kx, (B, S, D), dtype=jnp.float32)

    lim1 = 1.0 / np.sqrt(D)
    w1 = jax.random.uniform(k1, (D, H), jnp.float32, -lim1, lim1)
    b1 = jax.random.uniform(k2, (H,), jnp.float32, -lim1, lim1)
    lim2 = 1.0 / np.sqrt(H)
    w2 = jax.random.uniform(k3, (H, 1), jnp.float32, -lim2, lim2)
    b2 = jax.random.uniform(k4, (1,), jnp.float32, -lim2, lim2)

    # Mask: keep most positions, zero out a few (ensure >=1 kept per row).
    mask = (jax.random.uniform(km, (B, S)) > 0.3).astype(jnp.int32)
    mask = mask.at[:, 0].set(1)

    out = jax.block_until_ready(masked_attention_pool(x, w1, b1, w2, b2, mask=mask))
    ref = _reference(x, w1, b1, w2, b2, mask=mask)
    np.testing.assert_allclose(np.asarray(out), np.asarray(ref),
                               rtol=1e-4, atol=1e-4)

    # Also exercise the mask=None path.
    out_nm = jax.block_until_ready(masked_attention_pool(x, w1, b1, w2, b2))
    ref_nm = _reference(x, w1, b1, w2, b2)
    np.testing.assert_allclose(np.asarray(out_nm), np.asarray(ref_nm),
                               rtol=1e-4, atol=1e-4)


if __name__ == "__main__":
    key = jax.random.PRNGKey(0)
    k_small, k_big = jax.random.split(key)

    # Small case: single full-batch block (B <= 8).
    _run_case(k_small, B=2, S=8, D=32, H=128)

    # Larger case: multi-block grid with a partial last block (no batch pad),
    # exercising the tb > 8 tiling and masked OOB writeback path.
    _run_case(k_big, B=300, S=8, D=32, H=128)

    print("KERNEL_OK")
</pallas_src>

<mosaic_0001>
module attributes {stable_mosaic.version = 11 : i64} {
  func.func @_masked_attn_pool_kernel(%arg0: i32, %arg1: memref<2x8x32xf32, #tpu.memory_space<vmem>>, %arg2: memref<2x8xf32, #tpu.memory_space<vmem>>, %arg3: memref<32x128xf32, #tpu.memory_space<vmem>>, %arg4: memref<1x128xf32, #tpu.memory_space<vmem>>, %arg5: memref<1x128xf32, #tpu.memory_space<vmem>>, %arg6: memref<1x1xf32, #tpu.memory_space<vmem>>, %arg7: memref<2x32xf32, #tpu.memory_space<vmem>>) attributes {dimension_semantics = [#tpu.dimension_semantics<parallel>], iteration_bounds = array<i64: 1>, scalar_prefetch = 0 : i64, scratch_operands = 0 : i64, tpu.core_type = #tpu.core_type<tc>, window_params = [{transform_indices = @transform_0, window_bounds = array<i64: 2, 8, 32>}, {transform_indices = @transform_1, window_bounds = array<i64: 2, 8>}, {pipeline_mode = #tpu.pipeline_mode<synchronous>, transform_indices = @transform_2, window_bounds = array<i64: 32, 128>}, {pipeline_mode = #tpu.pipeline_mode<synchronous>, transform_indices = @transform_3, window_bounds = array<i64: 1, 128>}, {pipeline_mode = #tpu.pipeline_mode<synchronous>, transform_indices = @transform_4, window_bounds = array<i64: 1, 128>}, {pipeline_mode = #tpu.pipeline_mode<synchronous>, transform_indices = @transform_5, window_bounds = array<i64: 1, 1>}, {transform_indices = @transform_6, window_bounds = array<i64: 2, 32>}]} {
    %c0 = arith.constant 0 : index
    %c0_0 = arith.constant 0 : index
    %c0_1 = arith.constant 0 : index
    %0 = vector.load %arg1[%c0, %c0_0, %c0_1] : memref<2x8x32xf32, #tpu.memory_space<vmem>>, vector<2x8x32xf32>
    %1 = vector.shape_cast %0 : vector<2x8x32xf32> to vector<16x32xf32>
    %c0_2 = arith.constant 0 : index
    %c0_3 = arith.constant 0 : index
    %2 = vector.load %arg3[%c0_2, %c0_3] : memref<32x128xf32, #tpu.memory_space<vmem>>, vector<32x128xf32>
    %cst = arith.constant dense<0.000000e+00> : vector<16x128xf32>
    %3 = tpu.matmul %1, %2, %cst {dimension_numbers = #tpu.dot_dimension_numbers<[1], [0], [0], [1], [0, 0, 1, 1], [], []>} : vector<16x32xf32>, vector<32x128xf32>, vector<16x128xf32> -> vector<16x128xf32>
    %c0_4 = arith.constant 0 : index
    %c0_5 = arith.constant 0 : index
    %4 = vector.load %arg4[%c0_4, %c0_5] : memref<1x128xf32, #tpu.memory_space<vmem>>, vector<1x128xf32>
    %5 = vector.broadcast %4 : vector<1x128xf32> to vector<16x128xf32>
    %6 = arith.addf %3, %5 : vector<16x128xf32>
    %7 = math.tanh %6 : vector<16x128xf32>
    %c0_6 = arith.constant 0 : index
    %c0_7 = arith.constant 0 : index
    %8 = vector.load %arg5[%c0_6, %c0_7] : memref<1x128xf32, #tpu.memory_space<vmem>>, vector<1x128xf32>
    %9 = vector.broadcast %8 : vector<1x128xf32> to vector<16x128xf32>
    %10 = arith.mulf %7, %9 : vector<16x128xf32>
    %cst_8 = arith.constant dense<0.000000e+00> : vector<16xf32>
    %11 = vector.multi_reduction <add>, %10, %cst_8 [1] : vector<16x128xf32> to vector<16xf32>
    %12 = vector.shape_cast %11 : vector<16xf32> to vector<16x1xf32>
    %c0_9 = arith.constant 0 : index
    %c0_10 = arith.constant 0 : index
    %13 = vector.load %arg6[%c0_9, %c0_10] : memref<1x1xf32, #tpu.memory_space<vmem>>, vector<1x1xf32>
    %14 = vector.broadcast %13 : vector<1x1xf32> to vector<16x1xf32>
    %15 = arith.addf %12, %14 : vector<16x1xf32>
    %16 = vector.shape_cast %15 : vector<16x1xf32> to vector<2x8x1xf32>
    %c0_11 = arith.constant 0 : index
    %c0_12 = arith.constant 0 : index
    %17 = vector.load %arg2[%c0_11, %c0_12] : memref<2x8xf32, #tpu.memory_space<vmem>>, vector<2x8xf32>
    %18 = vector.shape_cast %17 : vector<2x8xf32> to vector<2x8x1xf32>
    %19 = arith.addf %16, %18 : vector<2x8x1xf32>
    %cst_13 = arith.constant dense<0xFF800000> : vector<2x1xf32>
    %20 = vector.multi_reduction <maximumf>, %19, %cst_13 [1] : vector<2x8x1xf32> to vector<2x1xf32>
    %21 = vector.shape_cast %20 : vector<2x1xf32> to vector<2x1x1xf32>
    %22 = vector.broadcast %21 : vector<2x1x1xf32> to vector<2x8x1xf32>
    %23 = arith.subf %19, %22 : vector<2x8x1xf32>
    %24 = math.exp %23 : vector<2x8x1xf32>
    %cst_14 = arith.constant dense<0.000000e+00> : vector<2x1xf32>
    %25 = vector.multi_reduction <add>, %24, %cst_14 [1] : vector<2x8x1xf32> to vector<2x1xf32>
    %26 = vector.shape_cast %25 : vector<2x1xf32> to vector<2x1x1xf32>
    %27 = vector.broadcast %26 : vector<2x1x1xf32> to vector<2x8x1xf32>
    %28 = arith.divf %24, %27 : vector<2x8x1xf32>
    %29 = vector.broadcast %28 : vector<2x8x1xf32> to vector<2x8x32xf32>
    %30 = arith.mulf %0, %29 : vector<2x8x32xf32>
    %cst_15 = arith.constant dense<0.000000e+00> : vector<2x32xf32>
    %31 = vector.multi_reduction <add>, %30, %cst_15 [1] : vector<2x8x32xf32> to vector<2x32xf32>
    %c0_16 = arith.constant 0 : index
    %c0_17 = arith.constant 0 : index
    %32 = vector.load %arg7[%c0_16, %c0_17] : memref<2x32xf32, #tpu.memory_space<vmem>>, vector<2x32xf32>
    tpu.vector_store %arg7[%c0_16, %c0_17], %31 {strides = array<i32>} : memref<2x32xf32, #tpu.memory_space<vmem>>, vector<2x32xf32>,
    return
  }
  func.func @transform_0(%arg0: i32) -> (i32, i32, i32) {
    %c0_i32 = arith.constant 0 : i32
    %c0_i32_0 = arith.constant 0 : i32
    %c0_i32_1 = arith.constant 0 : i32
    return %arg0, %c0_i32, %c0_i32_0 : i32, i32, i32
  }
  func.func @transform_1(%arg0: i32) -> (i32, i32) {
    %c0_i32 = arith.constant 0 : i32
    %c0_i32_0 = arith.constant 0 : i32
    return %arg0, %c0_i32 : i32, i32
  }
  func.func @transform_2(%arg0: i32) -> (i32, i32) {
    %c0_i32 = arith.constant 0 : i32
    %c0_i32_0 = arith.constant 0 : i32
    %c0_i32_1 = arith.constant 0 : i32
    return %c0_i32, %c0_i32_0 : i32, i32
  }
  func.func @transform_3(%arg0: i32) -> (i32, i32) {
    %c0_i32 = arith.constant 0 : i32
    %c0_i32_0 = arith.constant 0 : i32
    %c0_i32_1 = arith.constant 0 : i32
    return %c0_i32, %c0_i32_0 : i32, i32
  }
  func.func @transform_4(%arg0: i32) -> (i32, i32) {
    %c0_i32 = arith.constant 0 : i32
    %c0_i32_0 = arith.constant 0 : i32
    %c0_i32_1 = arith.constant 0 : i32
    return %c0_i32, %c0_i32_0 : i32, i32
  }
  func.func @transform_5(%arg0: i32) -> (i32, i32) {
    %c0_i32 = arith.constant 0 : i32
    %c0_i32_0 = arith.constant 0 : i32
    %c0_i32_1 = arith.constant 0 : i32
    return %c0_i32, %c0_i32_0 : i32, i32
  }
  func.func @transform_6(%arg0: i32) -> (i32, i32) {
    %c0_i32 = arith.constant 0 : i32
    %c0_i32_0 = arith.constant 0 : i32
    return %arg0, %c0_i32 : i32, i32
  }
}

</mosaic_0001>

<llo_original>
// kernel: tpu_custom_call.1
$region0: #{tpu_custom_call.1}
  #allocation0 [shape = 'u32[]', space=smem, size = 0x4, offset = 0x4, fixed_abs, tag = 'smem constant byte address 0x4 - core index']
  #allocation1 [shape = 'u32[144,128]{1,0:T(1,128)}', space=vmem, size = 0x12000, scoped, tag = 'internal scratch']
  #allocation2 [shape = 'f32[1,1]{1,0:T(1,128)S(1)}', space=vmem, size = 0x200, scoped, tag = 'scoped memory for tpu_custom_call.1']
  %s0 = inlined_call_operand.hbm [shape: f32[2,8,32], index: 0, kind: input, shape index: {}]
  %s1 = inlined_call_operand.vmem [shape: f32[2,8], index: 1, kind: input, shape index: {}]
  %s2 = inlined_call_operand.hbm [shape: f32[32,128], index: 2, kind: input, shape index: {}]
  %s3 = inlined_call_operand.vmem [shape: f32[1,128], index: 3, kind: input, shape index: {}]
  %s4 = inlined_call_operand.vmem [shape: f32[1,128], index: 4, kind: input, shape index: {}]
  %s5 = inlined_call_operand.<no memory space> [shape: f32[1,1], index: 5, kind: input, shape index: {}]
  %s6 = inlined_call_operand.hbm [shape: f32[2,32], index: 6, kind: output, shape index: {}]
  %s7 = sld [smem:[#allocation0]]
  $region42: #{tpu_custom_call.1} parent=0
    _
  %s9 = ssub.s32 1, %s7
  %s10 = scalar_select 0, %s9, %s7
  %v11 = vstv %s5
  %12 = vst [vmem:[#allocation2] sm:$0x1] %v11
  $region1: #{tpu_custom_call.1} parent=0
    #allocation3 [shape = 'u8[8192]{0}', space=vmem, size = 0x2000, scoped, tag = 'input window, operand 0, single buffered']
    #allocation4 [shape = 's32[1]{0}', space=sflag, size = 0x4, scoped, tag = 'scoped memory for tpu_custom_call.1']
    #allocation5 [shape = 's32[1]{0}', space=sflag, size = 0x4, scoped, tag = 'scoped memory for tpu_custom_call.1']
    #allocation6 [shape = 'u8[16384]{0}', space=vmem, size = 0x4000, scoped, tag = 'input window, operand 2, single buffered']
    #allocation7 [shape = 's32[1]{0}', space=sflag, size = 0x4, scoped, tag = 'scoped memory for tpu_custom_call.1']
    #allocation8 [shape = 'u8[1024]{0}', space=vmem, size = 0x400, scoped, tag = 'output window, operand 0, single buffered']
    %13 = vsyncpa [#allocation4], 0
    %14 = vsyncpa [#allocation7], 0
    %15 = vsyncpa [#allocation5], 0
    // Predicated region
    $region2: #{tpu_custom_call.1} parent=1 // pred_check
      _
    $region3: #{tpu_custom_call.1} parent=1 // pred_check_branch
      %17 = sbr.rel (0) target = $region5
    $region4: #{tpu_custom_call.1} parent=1 // pred_region
      %s19 = ssub.s32 256, 256
      %20 = vsyncadd [#allocation4], %s19
      %s21 = sshll.u32 [#allocation3], 4
      %s22 = int_to_ptr.vmem [resolvable:$true] %s21
      %27 = dma.hbm_to_vmem [thread:$0]  %s0, 256, %s22, [#allocation4], 128, 128, 8
    $region5: #{tpu_custom_call.1} parent=1 // pred_fallthru
      _
    // Predicated region
    $region6: #{tpu_custom_call.1} parent=1 // pred_check
      _
    $region7: #{tpu_custom_call.1} parent=1 // pred_check_branch
      %29 = sbr.rel (0) target = $region9
    $region8: #{tpu_custom_call.1} parent=1 // pred_region
      _
    $region9: #{tpu_custom_call.1} parent=1 // pred_fallthru
      _
    // Predicated region
    $region10: #{tpu_custom_call.1} parent=1 // pred_check
      _
    $region11: #{tpu_custom_call.1} parent=1 // pred_check_branch
      %31 = sbr.rel (0) target = $region13
    $region12: #{tpu_custom_call.1} parent=1 // pred_region
      %s33 = ssub.s32 512, 512
      %34 = vsyncadd [#allocation7], %s33
      %s35 = sshll.u32 [#allocation6], 4
      %s36 = int_to_ptr.vmem [resolvable:$true] %s35
      %41 = dma.hbm_to_vmem [thread:$0]  %s2, 512, %s36, [#allocation7], 128, 128, 8
    $region13: #{tpu_custom_call.1} parent=1 // pred_fallthru
      _
    // Predicated region
    $region14: #{tpu_custom_call.1} parent=1 // pred_check
      _
    $region15: #{tpu_custom_call.1} parent=1 // pred_check_branch
      %43 = sbr.rel (0) target = $region17
    $region16: #{tpu_custom_call.1} parent=1 // pred_region
      _
    $region17: #{tpu_custom_call.1} parent=1 // pred_fallthru
      _
    // Predicated region
    $region18: #{tpu_custom_call.1} parent=1 // pred_check
      _
    $region19: #{tpu_custom_call.1} parent=1 // pred_check_branch
      %45 = sbr.rel (0) target = $region21
    $region20: #{tpu_custom_call.1} parent=1 // pred_region
      _
    $region21: #{tpu_custom_call.1} parent=1 // pred_fallthru
      _
    // Predicated region
    $region22: #{tpu_custom_call.1} parent=1 // pred_check
      _
    $region23: #{tpu_custom_call.1} parent=1 // pred_check_branch
      %47 = sbr.rel (0) target = $region25
    $region24: #{tpu_custom_call.1} parent=1 // pred_region
      _
    $region25: #{tpu_custom_call.1} parent=1 // pred_fallthru
      _
    // Predicated region
    $region26: #{tpu_custom_call.1} parent=1 // pred_check
      _
    $region27: #{tpu_custom_call.1} parent=1 // pred_check_branch
      %49 = sbr.rel (0) target = $region29
    $region28: #{tpu_custom_call.1} parent=1 // pred_region
      %50 = dma.done [#allocation4], 256
    $region29: #{tpu_custom_call.1} parent=1 // pred_fallthru
      _
    // Predicated region
    $region30: #{tpu_custom_call.1} parent=1 // pred_check
      _
    $region31: #{tpu_custom_call.1} parent=1 // pred_check_branch
      %52 = sbr.rel (0) target = $region33
    $region32: #{tpu_custom_call.1} parent=1 // pred_region
      %53 = dma.done [#allocation7], 512
    $region33: #{tpu_custom_call.1} parent=1 // pred_fallthru
      _
    %v54 = vld [vmem:[#allocation3] sm:$0xff]
    %v55 = vld [vmem:[#allocation3 + $0x8] sm:$0xff]
    %v56 = vld [vmem:[#allocation6] sm:$0xff]
    %v57 = vld [vmem:[#allocation6 + $0x8] sm:$0xff]
    %v58 = vld [vmem:[#allocation6 + $0x10] sm:$0xff]
    %v59 = vld [vmem:[#allocation6 + $0x18] sm:$0xff]
    %v60 = vld [vmem:[%s3] sm:$0x1]
    %v62 = vlaneseq
    %v63 = vshrl.u32 %v62, 7
    %v64 = vsub.s32 0, %v63
    %v65 = vrot.slane %v60, %v64
    %vm67 = vcmask 261120
    %v69 = vsel %vm67, %v54, 0
    %v72 = vsel %vm67, %v55, 0
    %74 = vmatprep.subr.mxu0 0.0
    %75 = vmatpush1.msra.mxu0 0.0
    %76 = vmatprep.subr.mxu0 0.0
    %77 = vmatpush1.msra.mxu0 0.0
    %78 = vmatprep.subr.mxu0 0.0
    %79 = vmatpush1.msra.mxu0 0.0
    %80 = vmatprep.subr.mxu0 0.0
    %81 = vmatpush1.msra.mxu0 0.0
    %82 = vmatprep.subr.mxu0 0.0
    %83 = vmatpush1.msra.mxu0 0.0
    %84 = vmatprep.subr.mxu0 0.0
    %85 = vmatpush1.msra.mxu0 0.0
    %86 = vmatprep.subr.mxu0 0.0
    %87 = vmatpush1.msra.mxu0 0.0
    %88 = vmatprep.subr.mxu0 0.0
    %89 = vmatpush1.msra.mxu0 0.0
    %90 = vmatprep.subr.mxu0 0.0
    %91 = vmatpush1.msra.mxu0 0.0
    %92 = vmatprep.subr.mxu0 0.0
    %93 = vmatpush1.msra.mxu0 0.0
    %94 = vmatprep.subr.mxu0 0.0
    %95 = vmatpush1.msra.mxu0 0.0
    %96 = vmatprep.subr.mxu0 0.0
    %97 = vmatpush1.msra.mxu0 0.0
    %98 = vmatprep.subr.mxu0 0.0
    %99 = vmatpush1.msra.mxu0 %v59
    %100 = vmatprep.subr.mxu0 0.0
    %101 = vmatpush1.msra.mxu0 %v58
    %102 = vmatprep.subr.mxu0 0.0
    %103 = vmatpush1.msra.mxu0 %v57
    %104 = vmatprep.subr.mxu0 0.0
    %105 = vmatpush1.msra.mxu0 %v56
    %106 = vmatprep.subr.mxu0 0.0
    %107 = vmatpush2.msra.mxu0 0.0
    %108 = vmatprep.subr.mxu0 0.0
    %109 = vmatpush2.msra.mxu0 0.0
    %110 = vmatprep.subr.mxu0 0.0
    %111 = vmatpush2.msra.mxu0 0.0
    %112 = vmatprep.subr.mxu0 0.0
    %113 = vmatpush2.msra.mxu0 0.0
    %114 = vmatprep.subr.mxu0 0.0
    %115 = vmatpush2.msra.mxu0 0.0
    %116 = vmatprep.subr.mxu0 0.0
    %117 = vmatpush2.msra.mxu0 0.0
    %118 = vmatprep.subr.mxu0 0.0
    %119 = vmatpush2.msra.mxu0 0.0
    %120 = vmatprep.subr.mxu0 0.0
    %121 = vmatpush2.msra.mxu0 0.0
    %122 = vmatprep.subr.mxu0 0.0
    %123 = vmatpush2.msra.mxu0 0.0
    %124 = vmatprep.subr.mxu0 0.0
    %125 = vmatpush2.msra.mxu0 0.0
    %126 = vmatprep.subr.mxu0 0.0
    %127 = vmatpush2.msra.mxu0 0.0
    %128 = vmatprep.subr.mxu0 0.0
    %129 = vmatpush2.msra.mxu0 0.0
    %130 = vmatprep.subr.mxu0 0.0
    %131 = vmatpush2.msra.mxu0 0.0
    %132 = vmatprep.subr.mxu0 0.0
    %133 = vmatpush2.msra.mxu0 0.0
    %134 = vmatprep.subr.mxu0 0.0
    %135 = vmatpush2.msra.mxu0 0.0
    %136 = vmatprep.subr.mxu0 0.0
    %137 = vmatpush2.msra.mxu0 0.0
    %138 = vmatprep.mubr.f32.mxu0 0.0
    %139 = vmatmul.mubr.f32.gmra.mxu0 %v69
    %v140 = vpop.f32.mrf.mxu0
    %v141 = vadd.f32 %v65, %v140
    %v142 = vpop.f32.mrf.mxu0
    %143 = vmatprep.mubr.f32.mxu0 0.0
    %144 = vmatmul.mubr.f32.gmra.mxu0 %v72
    %v145 = vpop.f32.mrf.mxu0
    %v146 = vadd.f32 %v65, %v145
    %v147 = vpop.f32.mrf.mxu0
    %148 = vdwg.mxu0
    %v149 = vtanh.pop %v141
    %v150 = vtanh.pop %v146
    %v151 = vld [vmem:[%s4] sm:$0x1]
    %v153 = vlaneseq
    %v154 = vshrl.u32 %v153, 7
    %v155 = vsub.s32 0, %v154
    %v156 = vrot.slane %v151, %v155
    %v158 = vmul.f32 %v149, %v156
    %v159 = vmul.f32 %v150, %v156
    %160 = vadd.xlane.f32.xlu0 %v158
    %v161 = vpop.xlane.xlu0 %160
    %162 = vadd.xlane.f32.xlu0 %v159
    %v163 = vpop.xlane.xlu0 %162
    %v164 = vld [vmem:[#allocation2] sm:$0x1]
    %v166 = vlaneseq
    %v167 = vshrl.u32 %v166, 7
    %v168 = vsub.s32 0, %v167
    %v169 = vrot.slane %v164, %v168
    %v171 = vadd.f32 %v161, %v169
    %v172 = vadd.f32 %v163, %v169
    %v173 = vld [vmem:[%s1] sm:$0x3]
    %v174 = vlaneseq
    %v175 = vshrl.u32 %v174, 7
    %v176 = vsub.s32 0, %v175
    %v177 = vrot.slane %v173, %v176
    %179 = vbcast.lane.b32.xlu0 %v177, 256
    %v180 = vpop.permute.xlu0 %179
    %v181 = vlaneseq
    %v182 = vshrl.u32 %v181, 7
    %v183 = vsub.s32 1, %v182
    %v184 = vrot.slane %v173, %v183
    %186 = vbcast.lane.b32.xlu0 %v184, 256
    %v187 = vpop.permute.xlu0 %186
    %v188 = vadd.f32 %v171, %v180
    %v189 = vadd.f32 %v172, %v187
    %vm190 = vcmask 7168
    %v191 = vsel %vm190, %v188, -inf
    %v192 = vrot.slane %v191, 4
    %v193 = vmax.f32 %v191, %v192
    %v194 = vrot.slane %v193, 2
    %v195 = vmax.f32 %v193, %v194
    %v196 = vrot.slane %v195, 1
    %v197 = vmax.f32 %v195, %v196
    %v198 = vsel %vm190, %v189, -inf
    %v199 = vrot.slane %v198, 4
    %v200 = vmax.f32 %v198, %v199
    %v201 = vrot.slane %v200, 2
    %v202 = vmax.f32 %v200, %v201
    %v203 = vrot.slane %v202, 1
    %v204 = vmax.f32 %v202, %v203
    %v205 = vsub.f32 %v188, %v197
    %v206 = vsub.f32 %v189, %v204
    %v207 = vmul.f32 %v205, 1.442695
    %v208 = vpow.pop %v207
    %v209 = vmul.f32 %v206, 1.442695
    %v210 = vpow.pop %v209
    %v211 = vsel %vm190, %v208, 0.0
    %v212 = vrot.slane %v211, 4
    %v213 = vadd.f32 %v211, %v212
    %v214 = vrot.slane %v213, 2
    %v215 = vadd.f32 %v213, %v214
    %v216 = vrot.slane %v215, 1
    %v217 = vadd.f32 %v215, %v216
    %v218 = vsel %vm190, %v210, 0.0
    %v219 = vrot.slane %v218, 4
    %v220 = vadd.f32 %v218, %v219
    %v221 = vrot.slane %v220, 2
    %v222 = vadd.f32 %v220, %v221
    %v223 = vrot.slane %v222, 1
    %v224 = vadd.f32 %v222, %v223
    %v225 = vrcp.pop %v217
    %v226 = vmul.f32 %v208, %v225
    %v227 = vrcp.pop %v224
    %v228 = vmul.f32 %v210, %v227
    %230 = vset.pattern.permute.xlu0 0
    %231 = vperm.xlu0 %230, %v226
    %v232 = vpop.permute.xlu0 %231
    %235 = vset.pattern.permute.xlu0 0
    %236 = vperm.xlu0 %235, %v228
    %v237 = vpop.permute.xlu0 %236
    %v239 = vmul.f32 %v54, %v232
    %v240 = vmul.f32 %v55, %v237
    %v241 = vsel %vm67, %v239, 0.0
    %v242 = vrot.slane %v241, 4
    %v243 = vadd.f32 %v241, %v242
    %v244 = vrot.slane %v243, 2
    %v245 = vadd.f32 %v243, %v244
    %v246 = vrot.slane %v245, 1
    %v247 = vadd.f32 %v245, %v246
    %v248 = vsel %vm67, %v240, 0.0
    %v249 = vrot.slane %v248, 4
    %v250 = vadd.f32 %v248, %v249
    %v251 = vrot.slane %v250, 2
    %v252 = vadd.f32 %v250, %v251
    %v253 = vrot.slane %v252, 1
    %v254 = vadd.f32 %v252, %v253
    %vm257 = vcmask 1041409
    %v258 = vsel %vm257, %v254, %v247
    %vm260 = vcmask 254976
    %261 = vst.msk [vmem:[#allocation8] sm:$0x3] %vm260, %v258
    // Predicated region
    $region34: #{tpu_custom_call.1} parent=1 // pred_check
      _
    $region35: #{tpu_custom_call.1} parent=1 // pred_check_branch
      %263 = sbr.rel (0) target = $region37
    $region36: #{tpu_custom_call.1} parent=1 // pred_region
      %s265 = ssub.s32 32, 32
      %266 = vsyncadd [#allocation5], %s265
      %s268 = sshll.u32 [#allocation8], 4
      %s269 = int_to_ptr.vmem [resolvable:$true] %s268
      %271 = dma.vmem_to_hbm [thread:$0]  %s269, 32, %s6, [#allocation5]
    $region37: #{tpu_custom_call.1} parent=1 // pred_fallthru
      _
    // Predicated region
    $region38: #{tpu_custom_call.1} parent=1 // pred_check
      _
    $region39: #{tpu_custom_call.1} parent=1 // pred_check_branch
      %273 = sbr.rel (0) target = $region41
    $region40: #{tpu_custom_call.1} parent=1 // pred_region
      %274 = dma.done [#allocation5], 32
    $region41: #{tpu_custom_call.1} parent=1 // pred_fallthru
      _
    %275 = vsyncpa [#allocation4], 1
    %276 = vsyncpa [#allocation7], 1
    %277 = vsyncpa [#allocation5], 1

</llo_original>
